<compile_context>
chip_gen: v6e
topology: v6e:2x2x1
jax: 0.10.0
libtpu: 0.0.40
codegen_flags: <defaults>
</compile_context>

<pallas_src>
import jax
import jax.numpy as jnp
from jax.experimental import pallas as pl
from jax.experimental.pallas import tpu as pltpu


def make_interp_matrix(L, R, dtype=jnp.float32):
    """Linear-interpolation resampling L -> R expressed as an (L, R) matrix.

    Matches F.interpolate(mode='linear', align_corners=False):
      coord(j) = (j + 0.5) * L / R - 0.5, clamped to [0, L-1].
    """
    j = jnp.arange(R, dtype=jnp.float32)
    coord = (j + 0.5) * (float(L) / float(R)) - 0.5
    coord = jnp.clip(coord, 0.0, float(L - 1))
    i0 = jnp.floor(coord).astype(jnp.int32)
    i1 = jnp.minimum(i0 + 1, L - 1)
    w1 = coord - i0.astype(jnp.float32)
    w0 = 1.0 - w1
    cols = jnp.arange(R)
    imat = jnp.zeros((L, R), dtype=jnp.float32)
    imat = imat.at[i0, cols].add(w0)
    imat = imat.at[i1, cols].add(w1)
    return imat.astype(dtype)


def _make_embed_kernel(S, cdtype, pad_cols):
    """S per-series MXU dots, assembled into one lane-dense (tile_n, S*E+pad) store."""
    def kernel(*refs):
        x_refs = refs[:S]
        m_refs = refs[S:2 * S]
        b_ref = refs[2 * S]
        o_ref = refs[2 * S + 1]
        parts = []
        for s in range(S):
            xs = x_refs[s][...]
            if xs.dtype != cdtype:
                xs = xs.astype(cdtype)            # in-kernel cast: no extra HBM pass
            parts.append(jnp.dot(xs, m_refs[s][...],
                                 preferred_element_type=jnp.float32))
        if pad_cols:
            parts.append(jnp.zeros((parts[0].shape[0], pad_cols), jnp.float32))
        acc = parts[0] if len(parts) == 1 else jnp.concatenate(parts, axis=-1)
        o_ref[...] = (acc + b_ref[...]).astype(o_ref.dtype)
    return kernel


def _make_pooled_kernel(S, cdtype, pad_cols):
    """Fused mean-pooling over S: sum of the S dots * 1/S + bias, (tile_n, E+pad)."""
    inv_s = 1.0 / float(S)

    def kernel(*refs):
        x_refs = refs[:S]
        m_refs = refs[S:2 * S]
        b_ref = refs[2 * S]
        o_ref = refs[2 * S + 1]
        acc = None
        for s in range(S):
            xs = x_refs[s][...]
            if xs.dtype != cdtype:
                xs = xs.astype(cdtype)
            d = jnp.dot(xs, m_refs[s][...], preferred_element_type=jnp.float32)
            acc = d if acc is None else acc + d
        acc = acc * inv_s
        if pad_cols:
            acc = jnp.concatenate(
                [acc, jnp.zeros((acc.shape[0], pad_cols), jnp.float32)], axis=-1)
        o_ref[...] = (acc + b_ref[...]).astype(o_ref.dtype)
    return kernel


def _round_up(x, m):
    return -(-x // m) * m


def _pick_row_tile(n, sublane, per_row_bytes, budget_bytes=20 << 20):
    """Pick (tile_n, n_padded).

    Prefer a large exact divisor of n (no padding, few grid steps); otherwise
    pad n up to a multiple of a large tile.  Never fall back to a single
    full-array block, and keep the streamed double-buffers within budget.
    """
    fit = max(sublane,
              (budget_bytes // max(per_row_bytes, 1)) // sublane * sublane)
    for cand in (2048, 1024, 512, 256, 128):
        if cand <= fit and cand % sublane == 0 and n % cand == 0:
            return cand, n
    tile = min(1024, fit, max(sublane, _round_up(n, sublane)))
    return tile, _round_up(n, tile)


def time_series_embedding(ts_list, weight, bias, resample_dim,
                          pooling=False, compute_dtype=jnp.bfloat16):
    """ts_list: list of S arrays, each (N, L_s) (lengths may differ).

    Returns (N, S, E), or (N, E) if pooling=True (mean pooling).

    compute_dtype: dtype of the MXU operands (fused weights stored in it; x is
    cast to it inside the kernel). Accumulation is always f32. Pass jnp.float32
    for bit-faithful matching of an f32 PyTorch module.
    """
    S = len(ts_list)
    N = ts_list[0].shape[0]
    R = int(resample_dim)
    E = weight.shape[1]
    out_dtype = ts_list[0].dtype
    cdtype = jnp.dtype(compute_dtype or out_dtype)

    # ---- fuse resample + projection offline, one small (L_s, E) per series ---
    w32 = weight.astype(jnp.float32)
    mats, lengths = [], []
    for t in ts_list:
        assert t.shape[0] == N, "all series must share the batch dimension"
        L = int(t.shape[-1])
        lengths.append(L)
        m = w32 if L == R else make_interp_matrix(L, R) @ w32
        mats.append(m.astype(cdtype))

    # ---- lane-dense output width (pad to a multiple of 128, slice later) -----
    cols = E if pooling else S * E
    cols_pad = _round_up(cols, 128)
    pad_cols = cols_pad - cols

    bias32 = bias.astype(jnp.float32)
    b_vals = bias32 if pooling else jnp.tile(bias32, S)
    b_row = jnp.zeros((1, cols_pad), jnp.float32).at[0, :cols].set(b_vals)

    # ---- row tiling (pad N instead of a single full block) -------------------
    x_isz = jnp.dtype(ts_list[0].dtype).itemsize
    o_isz = jnp.dtype(out_dtype).itemsize
    sublane = max(8, 32 // min(x_isz, o_isz))
    per_row_bytes = 2 * sum(lengths) * x_isz + 2 * cols_pad * o_isz  # dbl-buffered
    tile_n, n_pad = _pick_row_tile(N, sublane, per_row_bytes)
    grid = (n_pad // tile_n,)

    xs = list(ts_list)
    if n_pad != N:
        xs = [jnp.pad(t, ((0, n_pad - N), (0, 0))) for t in xs]

    # ---- VMEM budget: real buffer accounting + headroom, 32..48 MiB clamp ----
    m_isz = jnp.dtype(cdtype).itemsize
    est = (tile_n * per_row_bytes                         # x + out double buffers
           + sum(L * E for L in lengths) * m_isz          # single-buffered weights
           + cols_pad * 4                                 # single-buffered bias row
           + tile_n * cols_pad * 4)                       # f32 assembly temporaries
    vmem_limit = int(min(max(int(est * 1.5) + (4 << 20), 32 << 20), 48 << 20))

    kernel = (_make_pooled_kernel if pooling else _make_embed_kernel)(
        S, cdtype, pad_cols)

    in_specs = (
        [pl.BlockSpec((tile_n, L), lambda i: (i, 0)) for L in lengths]
        + [pl.BlockSpec((L, E), lambda i: (0, 0),
                        pipeline_mode=pl.Buffered(1)) for L in lengths]
        + [pl.BlockSpec((1, cols_pad), lambda i: (0, 0),
                        pipeline_mode=pl.Buffered(1))]
    )

    out = pl.pallas_call(
        kernel,
        out_shape=jax.ShapeDtypeStruct((n_pad, cols_pad), out_dtype),
        grid_spec=pltpu.PrefetchScalarGridSpec(
            num_scalar_prefetch=0,
            grid=grid,
            in_specs=in_specs,
            out_specs=pl.BlockSpec((tile_n, cols_pad), lambda i: (i, 0)),
        ),
        compiler_params=pltpu.CompilerParams(
            # N-tile axis is embarrassingly parallel; on v7x pltpu.CORE_PARALLEL
            # here would guarantee sharding across both TensorCores.
            dimension_semantics=("parallel",),
            vmem_limit_bytes=vmem_limit),
    )(*xs, *mats, b_row)

    if n_pad != N or cols_pad != cols:
        out = out[:N, :cols]
    if pooling:
        return out                                   # (N, E)
    # (N, S*E) row-major is already (N, S, E) -> free reshape
    return out.reshape(N, S, E)
    # TODO(synk): corruption_rate > 0 (random zero-mask) and channel_first=True
    # stacking paths are not implemented (module defaults are 0.0 / False).


if __name__ == "__main__":
    key = jax.random.PRNGKey(0)
    N, S = 2, 4                 # batch, number of time series
    R, E = 16, 32               # resample_dim, embedding size
    lengths = (24, 20, 16, 28)  # ragged raw lengths; one already == resample_dim

    k_ts, k_w, k_b = jax.random.split(key, 3)
    ts_keys = jax.random.split(k_ts, S)
    ts_list = [jax.random.normal(k, (N, L), dtype=jnp.float32)
               for k, L in zip(ts_keys, lengths)]

    # deterministic "model" parameters: nn.Linear(resample_dim, E)
    weight = jax.random.normal(k_w, (R, E), dtype=jnp.float32) * 0.1
    bias = jax.random.normal(k_b, (E,), dtype=jnp.float32) * 0.01

    # ---- default (pooling=False, bf16 compute) path --------------------------
    out = time_series_embedding(ts_list, weight, bias, resample_dim=R)
    out = jax.block_until_ready(out)
    assert out.shape == (N, S, E), out.shape

    # bf16-consistent reference (same operand rounding as the kernel, f32 accum)
    def fused_mat(L):
        return weight if L == R else make_interp_matrix(L, R) @ weight

    def bf16_ref(t, m):
        tb = t.astype(jnp.bfloat16).astype(jnp.float32)
        mb = m.astype(jnp.bfloat16).astype(jnp.float32)
        return tb @ mb + bias

    ref = jnp.stack([bf16_ref(t, fused_mat(t.shape[-1])) for t in ts_list], axis=1)
    assert jnp.allclose(out, ref, atol=1e-4, rtol=1e-4), \
        float(jnp.max(jnp.abs(out - ref)))

    # loose check against the exact-f32 module semantics (bf16 input rounding only)
    ref32 = jnp.stack(
        [t if t.shape[-1] == R else t @ make_interp_matrix(t.shape[-1], R)
         for t in ts_list], axis=1) @ weight + bias
    assert jnp.allclose(out, ref32, atol=5e-2, rtol=5e-2), \
        float(jnp.max(jnp.abs(out - ref32)))

    # ---- fused mean-pooling path ---------------------------------------------
    out_pool = jax.block_until_ready(
        time_series_embedding(ts_list, weight, bias, resample_dim=R, pooling=True))
    assert out_pool.shape == (N, E), out_pool.shape
    ref_pool = jnp.mean(ref, axis=1)
    assert jnp.allclose(out_pool, ref_pool, atol=1e-4, rtol=1e-4), \
        float(jnp.max(jnp.abs(out_pool - ref_pool)))

    print("KERNEL_OK")
</pallas_src>

<mosaic_0001>
module attributes {stable_mosaic.version = 11 : i64} {
  func.func @kernel(%arg0: i32, %arg1: memref<8x24xf32, #tpu.memory_space<vmem>>, %arg2: memref<8x20xf32, #tpu.memory_space<vmem>>, %arg3: memref<8x16xf32, #tpu.memory_space<vmem>>, %arg4: memref<8x28xf32, #tpu.memory_space<vmem>>, %arg5: memref<24x32xbf16, #tpu.memory_space<vmem>>, %arg6: memref<20x32xbf16, #tpu.memory_space<vmem>>, %arg7: memref<16x32xbf16, #tpu.memory_space<vmem>>, %arg8: memref<28x32xbf16, #tpu.memory_space<vmem>>, %arg9: memref<1x128xf32, #tpu.memory_space<vmem>>, %arg10: memref<8x128xf32, #tpu.memory_space<vmem>>) attributes {dimension_semantics = [#tpu.dimension_semantics<parallel>], iteration_bounds = array<i64: 1>, scalar_prefetch = 0 : i64, scratch_operands = 0 : i64, tpu.core_type = #tpu.core_type<tc>, window_params = [{transform_indices = @transform_0, window_bounds = array<i64: 8, 24>}, {transform_indices = @transform_1, window_bounds = array<i64: 8, 20>}, {transform_indices = @transform_2, window_bounds = array<i64: 8, 16>}, {transform_indices = @transform_3, window_bounds = array<i64: 8, 28>}, {pipeline_mode = #tpu.pipeline_mode<synchronous>, transform_indices = @transform_4, window_bounds = array<i64: 24, 32>}, {pipeline_mode = #tpu.pipeline_mode<synchronous>, transform_indices = @transform_5, window_bounds = array<i64: 20, 32>}, {pipeline_mode = #tpu.pipeline_mode<synchronous>, transform_indices = @transform_6, window_bounds = array<i64: 16, 32>}, {pipeline_mode = #tpu.pipeline_mode<synchronous>, transform_indices = @transform_7, window_bounds = array<i64: 28, 32>}, {pipeline_mode = #tpu.pipeline_mode<synchronous>, transform_indices = @transform_8, window_bounds = array<i64: 1, 128>}, {transform_indices = @transform_9, window_bounds = array<i64: 8, 128>}]} {
    %c0 = arith.constant 0 : index
    %c0_0 = arith.constant 0 : index
    %0 = vector.load %arg1[%c0, %c0_0] : memref<8x24xf32, #tpu.memory_space<vmem>>, vector<8x24xf32>
    %1 = arith.truncf %0 : vector<8x24xf32> to vector<8x24xbf16>
    %c0_1 = arith.constant 0 : index
    %c0_2 = arith.constant 0 : index
    %2 = vector.load %arg5[%c0_1, %c0_2] : memref<24x32xbf16, #tpu.memory_space<vmem>>, vector<24x32xbf16>
    %cst = arith.constant dense<0.000000e+00> : vector<8x32xf32>
    %3 = tpu.matmul %1, %2, %cst {dimension_numbers = #tpu.dot_dimension_numbers<[1], [0], [0], [1], [0, 0, 1, 1], [], []>} : vector<8x24xbf16>, vector<24x32xbf16>, vector<8x32xf32> -> vector<8x32xf32>
    %c0_3 = arith.constant 0 : index
    %c0_4 = arith.constant 0 : index
    %4 = vector.load %arg2[%c0_3, %c0_4] : memref<8x20xf32, #tpu.memory_space<vmem>>, vector<8x20xf32>
    %5 = arith.truncf %4 : vector<8x20xf32> to vector<8x20xbf16>
    %c0_5 = arith.constant 0 : index
    %c0_6 = arith.constant 0 : index
    %6 = vector.load %arg6[%c0_5, %c0_6] : memref<20x32xbf16, #tpu.memory_space<vmem>>, vector<20x32xbf16>
    %cst_7 = arith.constant dense<0.000000e+00> : vector<8x32xf32>
    %7 = tpu.matmul %5, %6, %cst_7 {dimension_numbers = #tpu.dot_dimension_numbers<[1], [0], [0], [1], [0, 0, 1, 1], [], []>} : vector<8x20xbf16>, vector<20x32xbf16>, vector<8x32xf32> -> vector<8x32xf32>
    %c0_8 = arith.constant 0 : index
    %c0_9 = arith.constant 0 : index
    %8 = vector.load %arg3[%c0_8, %c0_9] : memref<8x16xf32, #tpu.memory_space<vmem>>, vector<8x16xf32>
    %9 = arith.truncf %8 : vector<8x16xf32> to vector<8x16xbf16>
    %c0_10 = arith.constant 0 : index
    %c0_11 = arith.constant 0 : index
    %10 = vector.load %arg7[%c0_10, %c0_11] : memref<16x32xbf16, #tpu.memory_space<vmem>>, vector<16x32xbf16>
    %cst_12 = arith.constant dense<0.000000e+00> : vector<8x32xf32>
    %11 = tpu.matmul %9, %10, %cst_12 {dimension_numbers = #tpu.dot_dimension_numbers<[1], [0], [0], [1], [0, 0, 1, 1], [], []>} : vector<8x16xbf16>, vector<16x32xbf16>, vector<8x32xf32> -> vector<8x32xf32>
    %c0_13 = arith.constant 0 : index
    %c0_14 = arith.constant 0 : index
    %12 = vector.load %arg4[%c0_13, %c0_14] : memref<8x28xf32, #tpu.memory_space<vmem>>, vector<8x28xf32>
    %13 = arith.truncf %12 : vector<8x28xf32> to vector<8x28xbf16>
    %c0_15 = arith.constant 0 : index
    %c0_16 = arith.constant 0 : index
    %14 = vector.load %arg8[%c0_15, %c0_16] : memref<28x32xbf16, #tpu.memory_space<vmem>>, vector<28x32xbf16>
    %cst_17 = arith.constant dense<0.000000e+00> : vector<8x32xf32>
    %15 = tpu.matmul %13, %14, %cst_17 {dimension_numbers = #tpu.dot_dimension_numbers<[1], [0], [0], [1], [0, 0, 1, 1], [], []>} : vector<8x28xbf16>, vector<28x32xbf16>, vector<8x32xf32> -> vector<8x32xf32>
    %16 = tpu.concatenate %3, %7, %11, %15 in 1 : vector<8x32xf32>, vector<8x32xf32>, vector<8x32xf32>, vector<8x32xf32> -> vector<8x128xf32>
    %c0_18 = arith.constant 0 : index
    %c0_19 = arith.constant 0 : index
    %17 = vector.load %arg9[%c0_18, %c0_19] : memref<1x128xf32, #tpu.memory_space<vmem>>, vector<1x128xf32>
    %18 = vector.broadcast %17 : vector<1x128xf32> to vector<8x128xf32>
    %19 = arith.addf %16, %18 : vector<8x128xf32>
    %c0_20 = arith.constant 0 : index
    %c0_21 = arith.constant 0 : index
    %20 = vector.load %arg10[%c0_20, %c0_21] : memref<8x128xf32, #tpu.memory_space<vmem>>, vector<8x128xf32>
    tpu.vector_store %arg10[%c0_20, %c0_21], %19 {strides = array<i32>} : memref<8x128xf32, #tpu.memory_space<vmem>>, vector<8x128xf32>,
    return
  }
  func.func @transform_0(%arg0: i32) -> (i32, i32) {
    %c0_i32 = arith.constant 0 : i32
    %c0_i32_0 = arith.constant 0 : i32
    return %arg0, %c0_i32 : i32, i32
  }
  func.func @transform_1(%arg0: i32) -> (i32, i32) {
    %c0_i32 = arith.constant 0 : i32
    %c0_i32_0 = arith.constant 0 : i32
    return %arg0, %c0_i32 : i32, i32
  }
  func.func @transform_2(%arg0: i32) -> (i32, i32) {
    %c0_i32 = arith.constant 0 : i32
    %c0_i32_0 = arith.constant 0 : i32
    return %arg0, %c0_i32 : i32, i32
  }
  func.func @transform_3(%arg0: i32) -> (i32, i32) {
    %c0_i32 = arith.constant 0 : i32
    %c0_i32_0 = arith.constant 0 : i32
    return %arg0, %c0_i32 : i32, i32
  }
  func.func @transform_4(%arg0: i32) -> (i32, i32) {
    %c0_i32 = arith.constant 0 : i32
    %c0_i32_0 = arith.constant 0 : i32
    %c0_i32_1 = arith.constant 0 : i32
    return %c0_i32, %c0_i32_0 : i32, i32
  }
  func.func @transform_5(%arg0: i32) -> (i32, i32) {
    %c0_i32 = arith.constant 0 : i32
    %c0_i32_0 = arith.constant 0 : i32
    %c0_i32_1 = arith.constant 0 : i32
    return %c0_i32, %c0_i32_0 : i32, i32
  }
  func.func @transform_6(%arg0: i32) -> (i32, i32) {
    %c0_i32 = arith.constant 0 : i32
    %c0_i32_0 = arith.constant 0 : i32
    %c0_i32_1 = arith.constant 0 : i32
    return %c0_i32, %c0_i32_0 : i32, i32
  }
  func.func @transform_7(%arg0: i32) -> (i32, i32) {
    %c0_i32 = arith.constant 0 : i32
    %c0_i32_0 = arith.constant 0 : i32
    %c0_i32_1 = arith.constant 0 : i32
    return %c0_i32, %c0_i32_0 : i32, i32
  }
  func.func @transform_8(%arg0: i32) -> (i32, i32) {
    %c0_i32 = arith.constant 0 : i32
    %c0_i32_0 = arith.constant 0 : i32
    %c0_i32_1 = arith.constant 0 : i32
    return %c0_i32, %c0_i32_0 : i32, i32
  }
  func.func @transform_9(%arg0: i32) -> (i32, i32) {
    %c0_i32 = arith.constant 0 : i32
    %c0_i32_0 = arith.constant 0 : i32
    return %arg0, %c0_i32 : i32, i32
  }
}

</mosaic_0001>

<llo_original>
// kernel: tpu_custom_call.1
$region0: #{tpu_custom_call.1}
  #allocation0 [shape = 'u32[]', space=smem, size = 0x4, offset = 0x4, fixed_abs, tag = 'smem constant byte address 0x4 - core index']
  #allocation1 [shape = 'u32[144,128]{1,0:T(1,128)}', space=vmem, size = 0x12000, scoped, tag = 'internal scratch']
  %s0 = inlined_call_operand.hbm [shape: f32[8,24], index: 0, kind: input, shape index: {}]
  %s1 = inlined_call_operand.hbm [shape: f32[8,20], index: 1, kind: input, shape index: {}]
  %s2 = inlined_call_operand.hbm [shape: f32[8,16], index: 2, kind: input, shape index: {}]
  %s3 = inlined_call_operand.hbm [shape: f32[8,28], index: 3, kind: input, shape index: {}]
  %s4 = inlined_call_operand.hbm [shape: bf16[24,32], index: 4, kind: input, shape index: {}]
  %s5 = inlined_call_operand.hbm [shape: bf16[20,32], index: 5, kind: input, shape index: {}]
  %s6 = inlined_call_operand.vmem [shape: bf16[16,32], index: 6, kind: input, shape index: {}]
  %s7 = inlined_call_operand.hbm [shape: bf16[28,32], index: 7, kind: input, shape index: {}]
  %s8 = inlined_call_operand.vmem [shape: f32[1,128], index: 8, kind: input, shape index: {}]
  %s9 = inlined_call_operand.hbm [shape: f32[8,128], index: 9, kind: output, shape index: {}]
  %s10 = sld [smem:[#allocation0]]
  $region74: #{tpu_custom_call.1} parent=0
    _
  %s12 = ssub.s32 1, %s10
  %s13 = scalar_select 0, %s12, %s10
  $region1: #{tpu_custom_call.1} parent=0
    #allocation2 [shape = 'u8[4096]{0}', space=vmem, size = 0x1000, scoped, tag = 'input window, operand 0, single buffered']
    #allocation3 [shape = 's32[1]{0}', space=sflag, size = 0x4, scoped, tag = 'scoped memory for tpu_custom_call.1']
    #allocation4 [shape = 's32[1]{0}', space=sflag, size = 0x4, scoped, tag = 'scoped memory for tpu_custom_call.1']
    #allocation5 [shape = 'u8[4096]{0}', space=vmem, size = 0x1000, scoped, tag = 'input window, operand 1, single buffered']
    #allocation6 [shape = 's32[1]{0}', space=sflag, size = 0x4, scoped, tag = 'scoped memory for tpu_custom_call.1']
    #allocation7 [shape = 'u8[4096]{0}', space=vmem, size = 0x1000, scoped, tag = 'input window, operand 2, single buffered']
    #allocation8 [shape = 'u8[4096]{0}', space=vmem, size = 0x1000, scoped, tag = 'input window, operand 3, single buffered']
    #allocation9 [shape = 's32[1]{0}', space=sflag, size = 0x4, scoped, tag = 'scoped memory for tpu_custom_call.1']
    #allocation10 [shape = 'u8[6144]{0}', space=vmem, size = 0x1800, scoped, tag = 'input window, operand 4, single buffered']
    #allocation11 [shape = 'u8[6144]{0}', space=vmem, size = 0x1800, scoped, tag = 'input window, operand 5, single buffered']
    #allocation12 [shape = 's32[1]{0}', space=sflag, size = 0x4, scoped, tag = 'scoped memory for tpu_custom_call.1']
    #allocation13 [shape = 'u8[8192]{0}', space=vmem, size = 0x2000, scoped, tag = 'input window, operand 7, single buffered']
    #allocation14 [shape = 'u8[4096]{0}', space=vmem, size = 0x1000, scoped, tag = 'output window, operand 0, single buffered']
    %14 = vsyncpa [#allocation3], 0
    %15 = vsyncpa [#allocation6], 0
    %16 = vsyncpa [#allocation9], 0
    %17 = vsyncpa [#allocation12], 0
    %18 = vsyncpa [#allocation4], 0
    // Predicated region
    $region2: #{tpu_custom_call.1} parent=1 // pred_check
      _
    $region3: #{tpu_custom_call.1} parent=1 // pred_check_branch
      %20 = sbr.rel (0) target = $region5
    $region4: #{tpu_custom_call.1} parent=1 // pred_region
      %s22 = ssub.s32 128, 128
      %23 = vsyncadd [#allocation3], %s22
      %s25 = sshll.u32 [#allocation2], 4
      %s26 = int_to_ptr.vmem [resolvable:$true] %s25
      %28 = dma.hbm_to_vmem [thread:$0]  %s0, 128, %s26, [#allocation3]
    $region5: #{tpu_custom_call.1} parent=1 // pred_fallthru
      _
    // Predicated region
    $region6: #{tpu_custom_call.1} parent=1 // pred_check
      _
    $region7: #{tpu_custom_call.1} parent=1 // pred_check_branch
      %30 = sbr.rel (0) target = $region9
    $region8: #{tpu_custom_call.1} parent=1 // pred_region
      %s32 = ssub.s32 128, 128
      %33 = vsyncadd [#allocation6], %s32
      %s35 = sshll.u32 [#allocation5], 4
      %s36 = int_to_ptr.vmem [resolvable:$true] %s35
      %38 = dma.hbm_to_vmem [thread:$0]  %s1, 128, %s36, [#allocation6]
    $region9: #{tpu_custom_call.1} parent=1 // pred_fallthru
      _
    // Predicated region
    $region10: #{tpu_custom_call.1} parent=1 // pred_check
      _
    $region11: #{tpu_custom_call.1} parent=1 // pred_check_branch
      %40 = sbr.rel (0) target = $region13
    $region12: #{tpu_custom_call.1} parent=1 // pred_region
      %s42 = ssub.s32 128, 128
      %43 = vsyncadd [#allocation6], %s42
      %s45 = sshll.u32 [#allocation7], 4
      %s46 = int_to_ptr.vmem [resolvable:$true] %s45
      %48 = dma.hbm_to_vmem [thread:$0]  %s2, 128, %s46, [#allocation6]
    $region13: #{tpu_custom_call.1} parent=1 // pred_fallthru
      _
    // Predicated region
    $region14: #{tpu_custom_call.1} parent=1 // pred_check
      _
    $region15: #{tpu_custom_call.1} parent=1 // pred_check_branch
      %50 = sbr.rel (0) target = $region17
    $region16: #{tpu_custom_call.1} parent=1 // pred_region
      %s52 = ssub.s32 128, 128
      %53 = vsyncadd [#allocation9], %s52
      %s55 = sshll.u32 [#allocation8], 4
      %s56 = int_to_ptr.vmem [resolvable:$true] %s55
      %58 = dma.hbm_to_vmem [thread:$0]  %s3, 128, %s56, [#allocation9]
    $region17: #{tpu_custom_call.1} parent=1 // pred_fallthru
      _
    // Predicated region
    $region18: #{tpu_custom_call.1} parent=1 // pred_check
      _
    $region19: #{tpu_custom_call.1} parent=1 // pred_check_branch
      %60 = sbr.rel (0) target = $region21
    $region20: #{tpu_custom_call.1} parent=1 // pred_region
      %s62 = ssub.s32 192, 192
      %63 = vsyncadd [#allocation9], %s62
      %s64 = sshll.u32 [#allocation10], 4
      %s65 = int_to_ptr.vmem [resolvable:$true] %s64
      %70 = dma.hbm_to_vmem [thread:$0]  %s4, 192, %s65, [#allocation9], 64, 64, 4
    $region21: #{tpu_custom_call.1} parent=1 // pred_fallthru
      _
    // Predicated region
    $region22: #{tpu_custom_call.1} parent=1 // pred_check
      _
    $region23: #{tpu_custom_call.1} parent=1 // pred_check_branch
      %72 = sbr.rel (0) target = $region25
    $region24: #{tpu_custom_call.1} parent=1 // pred_region
      %s74 = ssub.s32 192, 192
      %75 = vsyncadd [#allocation12], %s74
      %s76 = sshll.u32 [#allocation11], 4
      %s77 = int_to_ptr.vmem [resolvable:$true] %s76
      %82 = dma.hbm_to_vmem [thread:$0]  %s5, 192, %s77, [#allocation12], 64, 64, 4
    $region25: #{tpu_custom_call.1} parent=1 // pred_fallthru
      _
    // Predicated region
    $region26: #{tpu_custom_call.1} parent=1 // pred_check
      _
    $region27: #{tpu_custom_call.1} parent=1 // pred_check_branch
      %84 = sbr.rel (0) target = $region29
    $region28: #{tpu_custom_call.1} parent=1 // pred_region
      _
    $region29: #{tpu_custom_call.1} parent=1 // pred_fallthru
      _
    // Predicated region
    $region30: #{tpu_custom_call.1} parent=1 // pred_check
      _
    $region31: #{tpu_custom_call.1} parent=1 // pred_check_branch
      %86 = sbr.rel (0) target = $region33
    $region32: #{tpu_custom_call.1} parent=1 // pred_region
      %s88 = ssub.s32 256, 256
      %89 = vsyncadd [#allocation12], %s88
      %s90 = sshll.u32 [#allocation13], 4
      %s91 = int_to_ptr.vmem [resolvable:$true] %s90
      %96 = dma.hbm_to_vmem [thread:$0]  %s7, 256, %s91, [#allocation12], 64, 64, 4
    $region33: #{tpu_custom_call.1} parent=1 // pred_fallthru
      _
    // Predicated region
    $region34: #{tpu_custom_call.1} parent=1 // pred_check
      _
    $region35: #{tpu_custom_call.1} parent=1 // pred_check_branch
      %98 = sbr.rel (0) target = $region37
    $region36: #{tpu_custom_call.1} parent=1 // pred_region
      _
    $region37: #{tpu_custom_call.1} parent=1 // pred_fallthru
      _
    // Predicated region
    $region38: #{tpu_custom_call.1} parent=1 // pred_check
      _
    $region39: #{tpu_custom_call.1} parent=1 // pred_check_branch
      %100 = sbr.rel (0) target = $region41
    $region40: #{tpu_custom_call.1} parent=1 // pred_region
      %101 = dma.done [#allocation3], 128
    $region41: #{tpu_custom_call.1} parent=1 // pred_fallthru
      _
    // Predicated region
    $region42: #{tpu_custom_call.1} parent=1 // pred_check
      _
    $region43: #{tpu_custom_call.1} parent=1 // pred_check_branch
      %103 = sbr.rel (0) target = $region45
    $region44: #{tpu_custom_call.1} parent=1 // pred_region
      %104 = dma.done [#allocation6], 128
    $region45: #{tpu_custom_call.1} parent=1 // pred_fallthru
      _
    // Predicated region
    $region46: #{tpu_custom_call.1} parent=1 // pred_check
      _
    $region47: #{tpu_custom_call.1} parent=1 // pred_check_branch
      %106 = sbr.rel (0) target = $region49
    $region48: #{tpu_custom_call.1} parent=1 // pred_region
      %107 = dma.done [#allocation6], 128
    $region49: #{tpu_custom_call.1} parent=1 // pred_fallthru
      _
    // Predicated region
    $region50: #{tpu_custom_call.1} parent=1 // pred_check
      _
    $region51: #{tpu_custom_call.1} parent=1 // pred_check_branch
      %109 = sbr.rel (0) target = $region53
    $region52: #{tpu_custom_call.1} parent=1 // pred_region
      %110 = dma.done [#allocation9], 128
    $region53: #{tpu_custom_call.1} parent=1 // pred_fallthru
      _
    // Predicated region
    $region54: #{tpu_custom_call.1} parent=1 // pred_check
      _
    $region55: #{tpu_custom_call.1} parent=1 // pred_check_branch
      %112 = sbr.rel (0) target = $region57
    $region56: #{tpu_custom_call.1} parent=1 // pred_region
      %113 = dma.done [#allocation9], 192
    $region57: #{tpu_custom_call.1} parent=1 // pred_fallthru
      _
    // Predicated region
    $region58: #{tpu_custom_call.1} parent=1 // pred_check
      _
    $region59: #{tpu_custom_call.1} parent=1 // pred_check_branch
      %115 = sbr.rel (0) target = $region61
    $region60: #{tpu_custom_call.1} parent=1 // pred_region
      %116 = dma.done [#allocation12], 192
    $region61: #{tpu_custom_call.1} parent=1 // pred_fallthru
      _
    // Predicated region
    $region62: #{tpu_custom_call.1} parent=1 // pred_check
      _
    $region63: #{tpu_custom_call.1} parent=1 // pred_check_branch
      %118 = sbr.rel (0) target = $region65
    $region64: #{tpu_custom_call.1} parent=1 // pred_region
      %119 = dma.done [#allocation12], 256
    $region65: #{tpu_custom_call.1} parent=1 // pred_fallthru
      _
    %v121 = vld [vmem:[#allocation2] sm:$0xff]
    %v122 = vpack.c.bf16 %v121, %v121
    %v123 = vld [vmem:[#allocation10] sm:$0xf]
    %v124 = vld [vmem:[#allocation10 + $0x4] sm:$0xf]
    %v125 = vld [vmem:[#allocation10 + $0x8] sm:$0xf]
    %v129 = vunpack.c.l.b16 %v123
    %v130 = vunpack.c.l.b16 %v124
    %v131 = vunpack.c.l.b16 %v125
    %v132 = vpack.c.b16 %v130, %v129
    %v133 = vpack.c.b16 %v131, %v131
    %vm135 = vcmask 195584
    %v137 = vsel %vm135, %v122, 0
    %vm139 = vcmask 1043456
    %v141 = vsel %vm139, %v133, 0
    %143 = vmatprep.subr.bf16.mxu0 0
    %144 = vmatpush1.bf16.msra.mxu0 0
    %145 = vmatprep.subr.bf16.mxu0 0
    %146 = vmatpush1.bf16.msra.mxu0 0
    %147 = vmatprep.subr.bf16.mxu0 0
    %148 = vmatpush1.bf16.msra.mxu0 0
    %149 = vmatprep.subr.bf16.mxu0 0
    %150 = vmatpush1.bf16.msra.mxu0 0
    %151 = vmatprep.subr.bf16.mxu0 0
    %152 = vmatpush1.bf16.msra.mxu0 0
    %153 = vmatprep.subr.bf16.mxu0 0
    %154 = vmatpush1.bf16.msra.mxu0 0
    %155 = vmatprep.subr.bf16.mxu0 0
    %156 = vmatpush1.bf16.msra.mxu0 %v141
    %157 = vmatprep.subr.bf16.mxu0 0
    %158 = vmatpush1.bf16.msra.mxu0 %v132
    %159 = vmatprep.subr.bf16.mxu0 0
    %160 = vmatpush2.bf16.msra.mxu0 0
    %161 = vmatprep.subr.bf16.mxu0 0
    %162 = vmatpush2.bf16.msra.mxu0 0
    %163 = vmatprep.subr.bf16.mxu0 0
    %164 = vmatpush2.bf16.msra.mxu0 0
    %165 = vmatprep.subr.bf16.mxu0 0
    %166 = vmatpush2.bf16.msra.mxu0 0
    %167 = vmatprep.subr.bf16.mxu0 0
    %168 = vmatpush2.bf16.msra.mxu0 0
    %169 = vmatprep.subr.bf16.mxu0 0
    %170 = vmatpush2.bf16.msra.mxu0 0
    %171 = vmatprep.subr.bf16.mxu0 0
    %172 = vmatpush2.bf16.msra.mxu0 0
    %173 = vmatprep.subr.bf16.mxu0 0
    %174 = vmatpush2.bf16.msra.mxu0 0
    %175 = vmatprep.mubr.bf16.mxu0 0
    %176 = vmatmul.mubr.bf16.gmra.mxu0 %v137
    %v177 = vpop.f32.mrf.mxu0
    %v178 = vadd.f32 0.0, %v177
    %v179 = vpop.f32.mrf.mxu0
    %v180 = vpop.f32.mrf.mxu0
    %v181 = vpop.f32.mrf.mxu0
    %182 = vdwg.mxu0
    %v183 = vld [vmem:[#allocation5] sm:$0xff]
    %v184 = vpack.c.bf16 %v183, %v183
    %v185 = vld [vmem:[#allocation11] sm:$0xf]
    %v186 = vld [vmem:[#allocation11 + $0x4] sm:$0xf]
    %v187 = vld [vmem:[#allocation11 + $0x8] sm:$0x3]
    %v191 = vunpack.c.l.b16 %v185
    %v192 = vunpack.c.l.b16 %v186
    %v193 = vunpack.c.l.b16 %v187
    %v194 = vpack.c.b16 %v192, %v191
    %v195 = vpack.c.b16 %v193, %v193
    %vm197 = vcmask 162816
    %v199 = vsel %vm197, %v184, 0
    %vm201 = vcmask 1041408
    %v203 = vsel %vm201, %v195, 0
    %205 = vmatprep.subr.bf16.mxu0 0
    %206 = vmatpush1.bf16.msra.mxu0 0
    %207 = vmatprep.subr.bf16.mxu0 0
    %208 = vmatpush1.bf16.msra.mxu0 0
    %209 = vmatprep.subr.bf16.mxu0 0
    %210 = vmatpush1.bf16.msra.mxu0 0
    %211 = vmatprep.subr.bf16.mxu0 0
    %212 = vmatpush1.bf16.msra.mxu0 0
    %213 = vmatprep.subr.bf16.mxu0 0
    %214 = vmatpush1.bf16.msra.mxu0 0
    %215 = vmatprep.subr.bf16.mxu0 0
    %216 = vmatpush1.bf16.msra.mxu0 0
    %217 = vmatprep.subr.bf16.mxu0 0
    %218 = vmatpush1.bf16.msra.mxu0 %v203
    %219 = vmatprep.subr.bf16.mxu0 0
    %220 = vmatpush1.bf16.msra.mxu0 %v194
    %221 = vmatprep.subr.bf16.mxu0 0
    %222 = vmatpush2.bf16.msra.mxu0 0
    %223 = vmatprep.subr.bf16.mxu0 0
    %224 = vmatpush2.bf16.msra.mxu0 0
    %225 = vmatprep.subr.bf16.mxu0 0
    %226 = vmatpush2.bf16.msra.mxu0 0
    %227 = vmatprep.subr.bf16.mxu0 0
    %228 = vmatpush2.bf16.msra.mxu0 0
    %229 = vmatprep.subr.bf16.mxu0 0
    %230 = vmatpush2.bf16.msra.mxu0 0
    %231 = vmatprep.subr.bf16.mxu0 0
    %232 = vmatpush2.bf16.msra.mxu0 0
    %233 = vmatprep.subr.bf16.mxu0 0
    %234 = vmatpush2.bf16.msra.mxu0 0
    %235 = vmatprep.subr.bf16.mxu0 0
    %236 = vmatpush2.bf16.msra.mxu0 0
    %237 = vmatprep.mubr.bf16.mxu0 0
    %238 = vmatmul.mubr.bf16.gmra.mxu0 %v199
    %v239 = vpop.f32.mrf.mxu0
    %v240 = vadd.f32 0.0, %v239
    %v241 = vpop.f32.mrf.mxu0
    %v242 = vpop.f32.mrf.mxu0
    %v243 = vpop.f32.mrf.mxu0
    %244 = vdwg.mxu0
    %v245 = vld [vmem:[#allocation7] sm:$0xff]
    %v246 = vpack.c.bf16 %v245, %v245
    %v247 = vld [vmem:[%s6] sm:$0xf]
    %v248 = vld [vmem:[%s6 + $0x4] sm:$0xf]
    %v251 = vunpack.c.l.b16 %v247
    %v252 = vunpack.c.l.b16 %v248
    %v253 = vpack.c.b16 %v252, %v251
    %vm255 = vcmask 130048
    %v257 = vsel %vm255, %v246, 0
    %259 = vmatprep.subr.bf16.mxu0 0
    %260 = vmatpush1.bf16.msra.mxu0 0
    %261 = vmatprep.subr.bf16.mxu0 0
    %262 = vmatpush1.bf16.msra.mxu0 0
    %263 = vmatprep.subr.bf16.mxu0 0
    %264 = vmatpush1.bf16.msra.mxu0 0
    %265 = vmatprep.subr.bf16.mxu0 0
    %266 = vmatpush1.bf16.msra.mxu0 0
    %267 = vmatprep.subr.bf16.mxu0 0
    %268 = vmatpush1.bf16.msra.mxu0 0
    %269 = vmatprep.subr.bf16.mxu0 0
    %270 = vmatpush1.bf16.msra.mxu0 0
    %271 = vmatprep.subr.bf16.mxu0 0
    %272 = vmatpush1.bf16.msra.mxu0 0
    %273 = vmatprep.subr.bf16.mxu0 0
    %274 = vmatpush1.bf16.msra.mxu0 %v253
    %275 = vmatprep.subr.bf16.mxu0 0
    %276 = vmatpush2.bf16.msra.mxu0 0
    %277 = vmatprep.subr.bf16.mxu0 0
    %278 = vmatpush2.bf16.msra.mxu0 0
    %279 = vmatprep.subr.bf16.mxu0 0
    %280 = vmatpush2.bf16.msra.mxu0 0
    %281 = vmatprep.subr.bf16.mxu0 0
    %282 = vmatpush2.bf16.msra.mxu0 0
    %283 = vmatprep.subr.bf16.mxu0 0
    %284 = vmatpush2.bf16.msra.mxu0 0
    %285 = vmatprep.subr.bf16.mxu0 0
    %286 = vmatpush2.bf16.msra.mxu0 0
    %287 = vmatprep.subr.bf16.mxu0 0
    %288 = vmatpush2.bf16.msra.mxu0 0
    %289 = vmatprep.subr.bf16.mxu0 0
    %290 = vmatpush2.bf16.msra.mxu0 0
    %291 = vmatprep.mubr.bf16.mxu0 0
    %292 = vmatmul.mubr.bf16.gmra.mxu0 %v257
    %v293 = vpop.f32.mrf.mxu0
    %v294 = vadd.f32 0.0, %v293
    %v295 = vpop.f32.mrf.mxu0
    %v296 = vpop.f32.mrf.mxu0
    %v297 = vpop.f32.mrf.mxu0
    %298 = vdwg.mxu0
    %v299 = vld [vmem:[#allocation8] sm:$0xff]
    %v300 = vpack.c.bf16 %v299, %v299
    %v301 = vld [vmem:[#allocation13] sm:$0xf]
    %v302 = vld [vmem:[#allocation13 + $0x4] sm:$0xf]
    %v303 = vld [vmem:[#allocation13 + $0x8] sm:$0xf]
    %v304 = vld [vmem:[#allocation13 + $0xc] sm:$0x3]
    %v309 = vunpack.c.l.b16 %v301
    %v310 = vunpack.c.l.b16 %v302
    %v311 = vunpack.c.l.b16 %v303
    %v312 = vunpack.c.l.b16 %v304
    %v313 = vpack.c.b16 %v310, %v309
    %v314 = vpack.c.b16 %v312, %v311
    %vm316 = vcmask 228352
    %v318 = vsel %vm316, %v300, 0
    %vm320 = vcmask 1045504
    %v322 = vsel %vm320, %v314, 0
    %324 = vmatprep.subr.bf16.mxu0 0
    %325 = vmatpush1.bf16.msra.mxu0 0
    %326 = vmatprep.subr.bf16.mxu0 0
    %327 = vmatpush1.bf16.msra.mxu0 0
    %328 = vmatprep.subr.bf16.mxu0 0
    %329 = vmatpush1.bf16.msra.mxu0 0
    %330 = vmatprep.subr.bf16.mxu0 0
    %331 = vmatpush1.bf16.msra.mxu0 0
    %332 = vmatprep.subr.bf16.mxu0 0
    %333 = vmatpush1.bf16.msra.mxu0 0
    %334 = vmatprep.subr.bf16.mxu0 0
    %335 = vmatpush1.bf16.msra.mxu0 0
    %336 = vmatprep.subr.bf16.mxu0 0
    %337 = vmatpush1.bf16.msra.mxu0 %v322
    %338 = vmatprep.subr.bf16.mxu0 0
    %339 = vmatpush1.bf16.msra.mxu0 %v313
    %340 = vmatprep.subr.bf16.mxu0 0
    %341 = vmatpush2.bf16.msra.mxu0 0
    %342 = vmatprep.subr.bf16.mxu0 0
    %343 = vmatpush2.bf16.msra.mxu0 0
    %344 = vmatprep.subr.bf16.mxu0 0
    %345 = vmatpush2.bf16.msra.mxu0 0
    %346 = vmatprep.subr.bf16.mxu0 0
    %347 = vmatpush2.bf16.msra.mxu0 0
    %348 = vmatprep.subr.bf16.mxu0 0
    %349 = vmatpush2.bf16.msra.mxu0 0
    %350 = vmatprep.subr.bf16.mxu0 0
    %351 = vmatpush2.bf16.msra.mxu0 0
    %352 = vmatprep.subr.bf16.mxu0 0
    %353 = vmatpush2.bf16.msra.mxu0 0
    %354 = vmatprep.subr.bf16.mxu0 0
    %355 = vmatpush2.bf16.msra.mxu0 0
    %356 = vmatprep.mubr.bf16.mxu0 0
    %357 = vmatmul.mubr.bf16.gmra.mxu0 %v318
    %v358 = vpop.f32.mrf.mxu0
    %v359 = vadd.f32 0.0, %v358
    %v360 = vpop.f32.mrf.mxu0
    %v361 = vpop.f32.mrf.mxu0
    %v362 = vpop.f32.mrf.mxu0
    %363 = vdwg.mxu0
    %365 = vrot.lane.b32.xlu0 %v240, 32
    %v366 = vpop.permute.xlu0 %365
    %369 = vrot.lane.b32.xlu0 %v294, 64
    %v370 = vpop.permute.xlu0 %369
    %373 = vrot.lane.b32.xlu0 %v359, 96
    %v374 = vpop.permute.xlu0 %373
    %vm376 = vcmask 261120
    %v377 = vsel %vm376, %v178, %v366
    %vm378 = vcmask 523264
    %v379 = vsel %vm378, %v377, %v370
    %vm380 = vcmask 785408
    %v381 = vsel %vm380, %v379, %v374
    %v382 = vld [vmem:[%s8] sm:$0x1]
    %v384 = vlaneseq
    %v385 = vshrl.u32 %v384, 7
    %v386 = vsub.s32 0, %v385
    %v387 = vrot.slane %v382, %v386
    %v389 = vadd.f32 %v381, %v387
    %390 = vst [vmem:[#allocation14] sm:$0xff] %v389
    // Predicated region
    $region66: #{tpu_custom_call.1} parent=1 // pred_check
      _
    $region67: #{tpu_custom_call.1} parent=1 // pred_check_branch
      %392 = sbr.rel (0) target = $region69
    $region68: #{tpu_custom_call.1} parent=1 // pred_region
      %s394 = ssub.s32 128, 128
      %395 = vsyncadd [#allocation4], %s394
      %s397 = sshll.u32 [#allocation14], 4
      %s398 = int_to_ptr.vmem [resolvable:$true] %s397
      %400 = dma.vmem_to_hbm [thread:$0]  %s398, 128, %s9, [#allocation4]
    $region69: #{tpu_custom_call.1} parent=1 // pred_fallthru
      _
    // Predicated region
    $region70: #{tpu_custom_call.1} parent=1 // pred_check
      _
    $region71: #{tpu_custom_call.1} parent=1 // pred_check_branch
      %402 = sbr.rel (0) target = $region73
    $region72: #{tpu_custom_call.1} parent=1 // pred_region
      %403 = dma.done [#allocation4], 128
    $region73: #{tpu_custom_call.1} parent=1 // pred_fallthru
      _
    %404 = vsyncpa [#allocation3], 1
    %405 = vsyncpa [#allocation6], 1
    %406 = vsyncpa [#allocation9], 1
    %407 = vsyncpa [#allocation12], 1
    %408 = vsyncpa [#allocation4], 1

</llo_original>
